<compile_context>
chip_gen: v7x
topology: tpu7x:2x2x1
jax: 0.10.0
libtpu: 0.0.40
codegen_flags: <defaults>
</compile_context>

<pallas_src>
import functools

import jax
import jax.numpy as jnp
from jax.experimental import pallas as pl
from jax.experimental.pallas import tpu as pltpu


def _round_up(x, m):
    return (x + m - 1) // m * m


def qnetwork_kernel(x_ref, w1_ref, b1_ref, w2_ref, b2_ref, w3_ref, b3_ref, o_ref):
    # Blind mask is already folded into w1 (done once per weight update).
    x = x_ref[...].astype(jnp.bfloat16)

    h = jnp.dot(x, w1_ref[...], preferred_element_type=jnp.float32) + b1_ref[...]
    h = jnp.maximum(h, 0.0).astype(jnp.bfloat16)

    h = jnp.dot(h, w2_ref[...], preferred_element_type=jnp.float32) + b2_ref[...]
    h = jnp.maximum(h, 0.0).astype(jnp.bfloat16)

    o_ref[...] = (
        jnp.dot(h, w3_ref[...], preferred_element_type=jnp.float32) + b3_ref[...]
    )


@functools.partial(jax.jit, static_argnames=("action_size", "block_batch"))
def qnetwork_forward(state, params, *, action_size, block_batch=256):
    """Fused QNetwork forward. `params` = prepared (bf16, padded) weights."""
    w1, b1, w2, b2, w3, b3 = params
    B, S = state.shape
    Hp = w1.shape[1]
    Ap = w3.shape[1]

    # Batch tile: big enough to amortize the ~0.35us/step grid overhead,
    # multiple of 8 (sublane), and divides the padded batch exactly.
    TB = min(block_batch, _round_up(B, 8))
    Bp = _round_up(B, TB)
    if Bp != B:
        state = jnp.pad(state, ((0, Bp - B), (0, 0)))

    full = lambda i: (0, 0)  # weights/biases: same block every step -> VMEM-resident
    out = pl.pallas_call(
        qnetwork_kernel,
        out_shape=jax.ShapeDtypeStruct((Bp, Ap), jnp.float32),
        grid=(Bp // TB,),
        in_specs=[
            pl.BlockSpec((TB, S), lambda i: (i, 0)),   # state tile (pipelined)
            pl.BlockSpec((S, Hp), full),               # w1 (mask folded in)
            pl.BlockSpec((1, Hp), full),               # b1
            pl.BlockSpec((Hp, Hp), full),              # w2
            pl.BlockSpec((1, Hp), full),               # b2
            pl.BlockSpec((Hp, Ap), full),              # w3 (action-padded)
            pl.BlockSpec((1, Ap), full),               # b3
        ],
        out_specs=pl.BlockSpec((TB, Ap), lambda i: (i, 0)),
        compiler_params=pltpu.CompilerParams(
            dimension_semantics=("parallel",),         # megacore-shard batch tiles
            vmem_limit_bytes=64 * 1024 * 1024,         # headroom for 1024-wide hidden
        ),
    )(state, w1, b1, w2, b2, w3, b3)

    # Strip batch padding and the zero-padded action columns.
    return out[:B, :action_size]


def init_params(key, state_size, action_size, hidden_size):
    """f32 parameters matching the PyTorch module, stored (in, out) for x @ W."""
    ks = jax.random.split(key, 6)

    def linear(kw, kb, fan_in, fan_out):
        bound = 1.0 / jnp.sqrt(jnp.float32(fan_in))
        w = jax.random.uniform(kw, (fan_in, fan_out), jnp.float32, -bound, bound)
        b = jax.random.uniform(kb, (1, fan_out), jnp.float32, -bound, bound)
        return w, b

    w1, b1 = linear(ks[0], ks[1], state_size, hidden_size)
    w2, b2 = linear(ks[2], ks[3], hidden_size, hidden_size)
    w3, b3 = linear(ks[4], ks[5], hidden_size, action_size)
    # blind=True mask parameter: 0.1 + zeros(1, state_size)
    mask = 0.1 + jnp.zeros((1, state_size), jnp.float32)
    return mask, w1, b1, w2, b2, w3, b3


def prepare_params(mask, w1, b1, w2, b2, w3, b3):
    """One-time (per weight update) prep for the kernel:
       fold blind mask into W1, cast weights to bf16, zero-pad hidden/action
       dims to multiples of 128 (lane-dense MXU passes, unmasked stores).
       Padded hidden units see zero weights/bias -> relu(0) = 0 -> contribute
       nothing, so results are unchanged."""
    S, H = w1.shape
    A = w3.shape[1]
    Hp = _round_up(H, 128)
    Ap = _round_up(A, 128)

    w1f = mask.reshape(S, 1) * w1  # (x*mask) @ W1 == x @ (diag(mask) @ W1)

    def pad(a, rows, cols):
        return jnp.pad(a, ((0, rows - a.shape[0]), (0, cols - a.shape[1])))

    w1p = pad(w1f, S, Hp).astype(jnp.bfloat16)
    b1p = pad(b1, 1, Hp)
    w2p = pad(w2, Hp, Hp).astype(jnp.bfloat16)
    b2p = pad(b2, 1, Hp)
    w3p = pad(w3, Hp, Ap).astype(jnp.bfloat16)
    b3p = pad(b3, 1, Ap)
    return w1p, b1p, w2p, b2p, w3p, b3p


if __name__ == "__main__":
    # Small but grid-exercising shapes (2 batch tiles of 128 rows).
    batch = 256
    state_size = 16
    action_size = 8
    hidden_size = 128  # small stand-in for the module's default 1024

    key = jax.random.PRNGKey(0)
    k_state, k_params = jax.random.split(key)

    state = jax.random.normal(k_state, (batch, state_size), jnp.float32)
    mask, w1, b1, w2, b2, w3, b3 = init_params(
        k_params, state_size, action_size, hidden_size
    )
    params = prepare_params(mask, w1, b1, w2, b2, w3, b3)

    out = qnetwork_forward(state, params, action_size=action_size, block_batch=128)
    out = jax.block_until_ready(out)
    assert out.shape == (batch, action_size)

    # Reference 1: identical bf16-operand / f32-accumulate semantics in plain JAX.
    w1p, b1p, w2p, b2p, w3p, b3p = params
    xb = state.astype(jnp.bfloat16)
    h = jnp.maximum(jnp.dot(xb, w1p, preferred_element_type=jnp.float32) + b1p, 0.0)
    h = jnp.maximum(
        jnp.dot(h.astype(jnp.bfloat16), w2p, preferred_element_type=jnp.float32) + b2p,
        0.0,
    )
    ref = jnp.dot(h.astype(jnp.bfloat16), w3p, preferred_element_type=jnp.float32) + b3p
    ref = ref[:, :action_size]
    assert jnp.allclose(out, ref, atol=1e-3, rtol=1e-3)

    # Reference 2: original module semantics in full f32 (explicit mask multiply,
    # unpadded f32 weights) -- loose tolerance accounts for bf16 weight rounding.
    x = state * mask
    h = jnp.maximum(x @ w1 + b1, 0.0)
    h = jnp.maximum(h @ w2 + b2, 0.0)
    ref_f32 = h @ w3 + b3
    assert jnp.allclose(out, ref_f32, atol=5e-2, rtol=5e-2)

    print("KERNEL_OK")
</pallas_src>

<mosaic_0001>
module attributes {stable_mosaic.version = 11 : i64} {
  func.func @qnetwork_kernel(%arg0: i32, %arg1: memref<128x16xf32, #tpu.memory_space<vmem>>, %arg2: memref<16x128xbf16, #tpu.memory_space<vmem>>, %arg3: memref<1x128xf32, #tpu.memory_space<vmem>>, %arg4: memref<128x128xbf16, #tpu.memory_space<vmem>>, %arg5: memref<1x128xf32, #tpu.memory_space<vmem>>, %arg6: memref<128x128xbf16, #tpu.memory_space<vmem>>, %arg7: memref<1x128xf32, #tpu.memory_space<vmem>>, %arg8: memref<128x128xf32, #tpu.memory_space<vmem>>) attributes {dimension_semantics = [#tpu.dimension_semantics<parallel>], iteration_bounds = array<i64: 2>, scalar_prefetch = 0 : i64, scratch_operands = 0 : i64, tpu.core_type = #tpu.core_type<tc>, window_params = [{transform_indices = @transform_0, window_bounds = array<i64: 128, 16>}, {pipeline_mode = #tpu.pipeline_mode<synchronous>, transform_indices = @transform_1, window_bounds = array<i64: 16, 128>}, {pipeline_mode = #tpu.pipeline_mode<synchronous>, transform_indices = @transform_2, window_bounds = array<i64: 1, 128>}, {pipeline_mode = #tpu.pipeline_mode<synchronous>, transform_indices = @transform_3, window_bounds = array<i64: 128, 128>}, {pipeline_mode = #tpu.pipeline_mode<synchronous>, transform_indices = @transform_4, window_bounds = array<i64: 1, 128>}, {pipeline_mode = #tpu.pipeline_mode<synchronous>, transform_indices = @transform_5, window_bounds = array<i64: 128, 128>}, {pipeline_mode = #tpu.pipeline_mode<synchronous>, transform_indices = @transform_6, window_bounds = array<i64: 1, 128>}, {transform_indices = @transform_7, window_bounds = array<i64: 128, 128>}]} {
    %c0 = arith.constant 0 : index
    %c0_0 = arith.constant 0 : index
    %0 = vector.load %arg1[%c0, %c0_0] : memref<128x16xf32, #tpu.memory_space<vmem>>, vector<128x16xf32>
    %1 = arith.truncf %0 : vector<128x16xf32> to vector<128x16xbf16>
    %c0_1 = arith.constant 0 : index
    %c0_2 = arith.constant 0 : index
    %2 = vector.load %arg2[%c0_1, %c0_2] : memref<16x128xbf16, #tpu.memory_space<vmem>>, vector<16x128xbf16>
    %cst = arith.constant dense<0.000000e+00> : vector<128x128xf32>
    %3 = tpu.matmul %1, %2, %cst {dimension_numbers = #tpu.dot_dimension_numbers<[1], [0], [0], [1], [0, 0, 1, 1], [], []>} : vector<128x16xbf16>, vector<16x128xbf16>, vector<128x128xf32> -> vector<128x128xf32>
    %c0_3 = arith.constant 0 : index
    %c0_4 = arith.constant 0 : index
    %4 = vector.load %arg3[%c0_3, %c0_4] : memref<1x128xf32, #tpu.memory_space<vmem>>, vector<1x128xf32>
    %5 = vector.broadcast %4 : vector<1x128xf32> to vector<128x128xf32>
    %6 = arith.addf %3, %5 : vector<128x128xf32>
    %cst_5 = arith.constant 0.000000e+00 : f32
    %7 = vector.broadcast %cst_5 : f32 to vector<128x128xf32>
    %8 = arith.maximumf %6, %7 : vector<128x128xf32>
    %9 = arith.truncf %8 : vector<128x128xf32> to vector<128x128xbf16>
    %c0_6 = arith.constant 0 : index
    %c0_7 = arith.constant 0 : index
    %10 = vector.load %arg4[%c0_6, %c0_7] : memref<128x128xbf16, #tpu.memory_space<vmem>>, vector<128x128xbf16>
    %cst_8 = arith.constant dense<0.000000e+00> : vector<128x128xf32>
    %11 = tpu.matmul %9, %10, %cst_8 {dimension_numbers = #tpu.dot_dimension_numbers<[1], [0], [0], [1], [0, 0, 1, 1], [], []>} : vector<128x128xbf16>, vector<128x128xbf16>, vector<128x128xf32> -> vector<128x128xf32>
    %c0_9 = arith.constant 0 : index
    %c0_10 = arith.constant 0 : index
    %12 = vector.load %arg5[%c0_9, %c0_10] : memref<1x128xf32, #tpu.memory_space<vmem>>, vector<1x128xf32>
    %13 = vector.broadcast %12 : vector<1x128xf32> to vector<128x128xf32>
    %14 = arith.addf %11, %13 : vector<128x128xf32>
    %cst_11 = arith.constant 0.000000e+00 : f32
    %15 = vector.broadcast %cst_11 : f32 to vector<128x128xf32>
    %16 = arith.maximumf %14, %15 : vector<128x128xf32>
    %17 = arith.truncf %16 : vector<128x128xf32> to vector<128x128xbf16>
    %c0_12 = arith.constant 0 : index
    %c0_13 = arith.constant 0 : index
    %18 = vector.load %arg6[%c0_12, %c0_13] : memref<128x128xbf16, #tpu.memory_space<vmem>>, vector<128x128xbf16>
    %cst_14 = arith.constant dense<0.000000e+00> : vector<128x128xf32>
    %19 = tpu.matmul %17, %18, %cst_14 {dimension_numbers = #tpu.dot_dimension_numbers<[1], [0], [0], [1], [0, 0, 1, 1], [], []>} : vector<128x128xbf16>, vector<128x128xbf16>, vector<128x128xf32> -> vector<128x128xf32>
    %c0_15 = arith.constant 0 : index
    %c0_16 = arith.constant 0 : index
    %20 = vector.load %arg7[%c0_15, %c0_16] : memref<1x128xf32, #tpu.memory_space<vmem>>, vector<1x128xf32>
    %21 = vector.broadcast %20 : vector<1x128xf32> to vector<128x128xf32>
    %22 = arith.addf %19, %21 : vector<128x128xf32>
    %c0_17 = arith.constant 0 : index
    %c0_18 = arith.constant 0 : index
    %23 = vector.load %arg8[%c0_17, %c0_18] : memref<128x128xf32, #tpu.memory_space<vmem>>, vector<128x128xf32>
    tpu.vector_store %arg8[%c0_17, %c0_18], %22 {strides = array<i32>} : memref<128x128xf32, #tpu.memory_space<vmem>>, vector<128x128xf32>,
    return
  }
  func.func @transform_0(%arg0: i32) -> (i32, i32) {
    %c0_i32 = arith.constant 0 : i32
    %c0_i32_0 = arith.constant 0 : i32
    return %arg0, %c0_i32 : i32, i32
  }
  func.func @transform_1(%arg0: i32) -> (i32, i32) {
    %c0_i32 = arith.constant 0 : i32
    %c0_i32_0 = arith.constant 0 : i32
    %c0_i32_1 = arith.constant 0 : i32
    return %c0_i32, %c0_i32_0 : i32, i32
  }
  func.func @transform_2(%arg0: i32) -> (i32, i32) {
    %c0_i32 = arith.constant 0 : i32
    %c0_i32_0 = arith.constant 0 : i32
    %c0_i32_1 = arith.constant 0 : i32
    return %c0_i32, %c0_i32_0 : i32, i32
  }
  func.func @transform_3(%arg0: i32) -> (i32, i32) {
    %c0_i32 = arith.constant 0 : i32
    %c0_i32_0 = arith.constant 0 : i32
    %c0_i32_1 = arith.constant 0 : i32
    return %c0_i32, %c0_i32_0 : i32, i32
  }
  func.func @transform_4(%arg0: i32) -> (i32, i32) {
    %c0_i32 = arith.constant 0 : i32
    %c0_i32_0 = arith.constant 0 : i32
    %c0_i32_1 = arith.constant 0 : i32
    return %c0_i32, %c0_i32_0 : i32, i32
  }
  func.func @transform_5(%arg0: i32) -> (i32, i32) {
    %c0_i32 = arith.constant 0 : i32
    %c0_i32_0 = arith.constant 0 : i32
    %c0_i32_1 = arith.constant 0 : i32
    return %c0_i32, %c0_i32_0 : i32, i32
  }
  func.func @transform_6(%arg0: i32) -> (i32, i32) {
    %c0_i32 = arith.constant 0 : i32
    %c0_i32_0 = arith.constant 0 : i32
    %c0_i32_1 = arith.constant 0 : i32
    return %c0_i32, %c0_i32_0 : i32, i32
  }
  func.func @transform_7(%arg0: i32) -> (i32, i32) {
    %c0_i32 = arith.constant 0 : i32
    %c0_i32_0 = arith.constant 0 : i32
    return %arg0, %c0_i32 : i32, i32
  }
}

</mosaic_0001>

<llo_original>
// kernel: qnetwork_forward.1
$region0: #{qnetwork_forward.1}
  #allocation0 [shape = 'u32[]', space=smem, size = 0x4, offset = 0x4, fixed_abs, tag = 'smem constant byte address 0x4 - core index']
  #allocation1 [shape = 'u32[144,128]{1,0:T(1,128)}', space=vmem, size = 0x12000, scoped, tag = 'internal scratch']
  %s0 = inlined_call_operand.hbm [shape: f32[256,16], index: 0, kind: input, shape index: {}]
  %s1 = inlined_call_operand.hbm [shape: bf16[16,128], index: 1, kind: input, shape index: {}]
  %s2 = inlined_call_operand.hbm [shape: f32[1,128], index: 2, kind: input, shape index: {}]
  %s3 = inlined_call_operand.hbm [shape: bf16[128,128], index: 3, kind: input, shape index: {}]
  %s4 = inlined_call_operand.hbm [shape: f32[1,128], index: 4, kind: input, shape index: {}]
  %s5 = inlined_call_operand.hbm [shape: bf16[128,128], index: 5, kind: input, shape index: {}]
  %s6 = inlined_call_operand.hbm [shape: f32[1,128], index: 6, kind: input, shape index: {}]
  %s7 = inlined_call_operand.hbm [shape: f32[256,128], index: 7, kind: output, shape index: {}]
  %s8 = sld [smem:[#allocation0]]
  $region89: #{qnetwork_forward.1} parent=0
    _
  %s10 = ssub.s32 1, %s8
  %s11 = scalar_select 0, %s10, %s8
  $region1: #{qnetwork_forward.1} parent=0
    #allocation2 [shape = 'u8[131072]{0}', space=vmem, size = 0x20000, scoped, tag = 'input window, operand 0']
    #allocation3 [shape = 's32[2]{0}', space=sflag, size = 0x8, scoped, tag = 'scoped memory for qnetwork_forward.1']
    #allocation4 [shape = 's32[2]{0}', space=sflag, size = 0x8, scoped, tag = 'scoped memory for qnetwork_forward.1']
    #allocation5 [shape = 'u8[4096]{0}', space=vmem, size = 0x1000, scoped, tag = 'input window, operand 1, single buffered']
    #allocation6 [shape = 's32[1]{0}', space=sflag, size = 0x4, scoped, tag = 'scoped memory for qnetwork_forward.1']
    #allocation7 [shape = 'u8[512]{0}', space=vmem, size = 0x400, scoped, tag = 'input window, operand 2, single buffered']
    #allocation8 [shape = 'u8[32768]{0}', space=vmem, size = 0x8000, scoped, tag = 'input window, operand 3, single buffered']
    #allocation9 [shape = 's32[1]{0}', space=sflag, size = 0x4, scoped, tag = 'scoped memory for qnetwork_forward.1']
    #allocation10 [shape = 'u8[512]{0}', space=vmem, size = 0x400, scoped, tag = 'input window, operand 4, single buffered']
    #allocation11 [shape = 'u8[32768]{0}', space=vmem, size = 0x8000, scoped, tag = 'input window, operand 5, single buffered']
    #allocation12 [shape = 's32[1]{0}', space=sflag, size = 0x4, scoped, tag = 'scoped memory for qnetwork_forward.1']
    #allocation13 [shape = 'u8[512]{0}', space=vmem, size = 0x400, scoped, tag = 'input window, operand 6, single buffered']
    #allocation14 [shape = 'u8[131072]{0}', space=vmem, size = 0x20000, scoped, tag = 'output window, operand 0']
    %12 = vsyncpa [#allocation3], 0
    %s13 = scalar_lea.sflag [#allocation3], 1
    %14 = vsyncpa %s13, 0
    %15 = vsyncpa [#allocation6], 0
    %16 = vsyncpa [#allocation9], 0
    %17 = vsyncpa [#allocation12], 0
    %18 = vsyncpa [#allocation4], 0
    %s19 = scalar_lea.sflag [#allocation4], 1
    %20 = vsyncpa %s19, 0
    loop: start=0, step=1, limit=4
    $region2: #{qnetwork_forward.1} parent=1 // loop_pre_header
      _
    $region3: #{qnetwork_forward.1} parent=1 // loop_header
      %s22 = sphi 0, %s26
      %p23 = scmp.ge.s32.totalorder %s22, 4
      %s32 = sphi 0, %s34
      %s35 = sphi 0, %s32
      %s36 = sphi 0, %s35
      %s52 = sphi 0, %s36
      %s56 = sphi 0, %s56
      %s58 = sphi 0, %s56
      %s59 = sphi 0, %s58
      %s73 = sphi 0, %s59
      %s77 = sphi 0, %s77
      %s79 = sphi 0, %s77
      %s80 = sphi 0, %s79
      %s94 = sphi 0, %s80
      %s98 = sphi 0, %s98
      %s100 = sphi 0, %s98
      %s101 = sphi 0, %s100
      %s115 = sphi 0, %s101
      %s119 = sphi 0, %s119
      %s121 = sphi 0, %s119
      %s122 = sphi 0, %s121
      %s136 = sphi 0, %s122
      %s140 = sphi 0, %s140
      %s142 = sphi 0, %s140
      %s143 = sphi 0, %s142
      %s157 = sphi 0, %s143
      %s161 = sphi 0, %s161
      %s163 = sphi 0, %s161
      %s164 = sphi 0, %s163
      %s178 = sphi 0, %s164
      %s184 = sphi 0, %s186
      %s187 = sphi 0, %s184
      %s188 = sphi 0, %s187
      %s204 = sphi 0, %s188
    $region4: #{qnetwork_forward.1} parent=1 // loop_header_branch
      %25 = sbr.rel (%p23) target = $region8
    $region5: #{qnetwork_forward.1} parent=1 // loop_body
      %s27 = ssub.s32 %s22, 1
      %s28 = ssub.s32 %s22, 2
      %s29 = sadd.s32 %s22, 1
      %s30 = ssub.s32 %s22, %s29
      %p31 = scmp.eq.s32.totalorder %s30, 0
      %s33 = sadd.s32 %s32, 1
      %s34 = scalar_select %p31, %s32, %s33
      %p37 = pneg %p31
      %p38 = scmp.eq.s32.totalorder %s22, 1
      %p39 = por %p37, %p38
      %p40 = scmp.ne.s32.totalorder %s32, %s35
      %p41 = scmp.eq.s32.totalorder %s22, 0
      %p42 = por %p40, %p41
      %p43 = scmp.ne.s32.totalorder %s32, %s35
      %p44 = scmp.eq.s32.totalorder %s27, 1
      %p45 = por %p43, %p44
      %p46 = scmp.ne.s32.totalorder %s35, %s36
      %p47 = scmp.eq.s32.totalorder %s27, 0
      %p48 = por %p46, %p47
      %p49 = scmp.ne.s32.totalorder %s35, %s36
      %p50 = scmp.eq.s32.totalorder %s28, 1
      %p51 = por %p49, %p50
      %p53 = scmp.ne.s32.totalorder %s36, %s52
      %p54 = scmp.eq.s32.totalorder %s28, 0
      %p55 = por %p53, %p54
      %s57 = sadd.s32 %s56, 1
      %p60 = scmp.eq.s32.totalorder %s22, 1
      %p61 = scmp.ne.s32.totalorder %s56, %s58
      %p62 = scmp.eq.s32.totalorder %s22, 0
      %p63 = por %p61, %p62
      %p64 = scmp.ne.s32.totalorder %s56, %s58
      %p65 = scmp.eq.s32.totalorder %s27, 1
      %p66 = por %p64, %p65
      %p67 = scmp.ne.s32.totalorder %s58, %s59
      %p68 = scmp.eq.s32.totalorder %s27, 0
      %p69 = por %p67, %p68
      %p70 = scmp.ne.s32.totalorder %s58, %s59
      %p71 = scmp.eq.s32.totalorder %s28, 1
      %p72 = por %p70, %p71
      %p74 = scmp.ne.s32.totalorder %s59, %s73
      %p75 = scmp.eq.s32.totalorder %s28, 0
      %p76 = por %p74, %p75
      %s78 = sadd.s32 %s77, 1
      %p81 = scmp.eq.s32.totalorder %s22, 1
      %p82 = scmp.ne.s32.totalorder %s77, %s79
      %p83 = scmp.eq.s32.totalorder %s22, 0
      %p84 = por %p82, %p83
      %p85 = scmp.ne.s32.totalorder %s77, %s79
      %p86 = scmp.eq.s32.totalorder %s27, 1
      %p87 = por %p85, %p86
      %p88 = scmp.ne.s32.totalorder %s79, %s80
      %p89 = scmp.eq.s32.totalorder %s27, 0
      %p90 = por %p88, %p89
      %p91 = scmp.ne.s32.totalorder %s79, %s80
      %p92 = scmp.eq.s32.totalorder %s28, 1
      %p93 = por %p91, %p92
      %p95 = scmp.ne.s32.totalorder %s80, %s94
      %p96 = scmp.eq.s32.totalorder %s28, 0
      %p97 = por %p95, %p96
      %s99 = sadd.s32 %s98, 1
      %p102 = scmp.eq.s32.totalorder %s22, 1
      %p103 = scmp.ne.s32.totalorder %s98, %s100
      %p104 = scmp.eq.s32.totalorder %s22, 0
      %p105 = por %p103, %p104
      %p106 = scmp.ne.s32.totalorder %s98, %s100
      %p107 = scmp.eq.s32.totalorder %s27, 1
      %p108 = por %p106, %p107
      %p109 = scmp.ne.s32.totalorder %s100, %s101
      %p110 = scmp.eq.s32.totalorder %s27, 0
      %p111 = por %p109, %p110
      %p112 = scmp.ne.s32.totalorder %s100, %s101
      %p113 = scmp.eq.s32.totalorder %s28, 1
      %p114 = por %p112, %p113
      %p116 = scmp.ne.s32.totalorder %s101, %s115
      %p117 = scmp.eq.s32.totalorder %s28, 0
      %p118 = por %p116, %p117
      %s120 = sadd.s32 %s119, 1
      %p123 = scmp.eq.s32.totalorder %s22, 1
      %p124 = scmp.ne.s32.totalorder %s119, %s121
      %p125 = scmp.eq.s32.totalorder %s22, 0
      %p126 = por %p124, %p125
      %p127 = scmp.ne.s32.totalorder %s119, %s121
      %p128 = scmp.eq.s32.totalorder %s27, 1
      %p129 = por %p127, %p128
      %p130 = scmp.ne.s32.totalorder %s121, %s122
      %p131 = scmp.eq.s32.totalorder %s27, 0
      %p132 = por %p130, %p131
      %p133 = scmp.ne.s32.totalorder %s121, %s122
      %p134 = scmp.eq.s32.totalorder %s28, 1
      %p135 = por %p133, %p134
      %p137 = scmp.ne.s32.totalorder %s122, %s136
      %p138 = scmp.eq.s32.totalorder %s28, 0
      %p139 = por %p137, %p138
      %s141 = sadd.s32 %s140, 1
      %p144 = scmp.eq.s32.totalorder %s22, 1
      %p145 = scmp.ne.s32.totalorder %s140, %s142
      %p146 = scmp.eq.s32.totalorder %s22, 0
      %p147 = por %p145, %p146
      %p148 = scmp.ne.s32.totalorder %s140, %s142
      %p149 = scmp.eq.s32.totalorder %s27, 1
      %p150 = por %p148, %p149
      %p151 = scmp.ne.s32.totalorder %s142, %s143
      %p152 = scmp.eq.s32.totalorder %s27, 0
      %p153 = por %p151, %p152
      %p154 = scmp.ne.s32.totalorder %s142, %s143
      %p155 = scmp.eq.s32.totalorder %s28, 1
      %p156 = por %p154, %p155
      %p158 = scmp.ne.s32.totalorder %s143, %s157
      %p159 = scmp.eq.s32.totalorder %s28, 0
      %p160 = por %p158, %p159
      %s162 = sadd.s32 %s161, 1
      %p165 = scmp.eq.s32.totalorder %s22, 1
      %p166 = scmp.ne.s32.totalorder %s161, %s163
      %p167 = scmp.eq.s32.totalorder %s22, 0
      %p168 = por %p166, %p167
      %p169 = scmp.ne.s32.totalorder %s161, %s163
      %p170 = scmp.eq.s32.totalorder %s27, 1
      %p171 = por %p169, %p170
      %p172 = scmp.ne.s32.totalorder %s163, %s164
      %p173 = scmp.eq.s32.totalorder %s27, 0
      %p174 = por %p172, %p173
      %p175 = scmp.ne.s32.totalorder %s163, %s164
      %p176 = scmp.eq.s32.totalorder %s28, 1
      %p177 = por %p175, %p176
      %p179 = scmp.ne.s32.totalorder %s164, %s178
      %p180 = scmp.eq.s32.totalorder %s28, 0
      %p181 = por %p179, %p180
      %s182 = ssub.s32 %s22, %s29
      %p183 = scmp.eq.s32.totalorder %s182, 0
      %s185 = sadd.s32 %s184, 1
      %s186 = scalar_select %p183, %s184, %s185
      %p189 = pneg %p183
      %p190 = scmp.eq.s32.totalorder %s22, 1
      %p191 = por %p189, %p190
      %p192 = scmp.ne.s32.totalorder %s184, %s187
      %p193 = scmp.eq.s32.totalorder %s22, 0
      %p194 = por %p192, %p193
      %p195 = scmp.ne.s32.totalorder %s184, %s187
      %p196 = scmp.eq.s32.totalorder %s27, 1
      %p197 = por %p195, %p196
      %p198 = scmp.ne.s32.totalorder %s187, %s188
      %p199 = scmp.eq.s32.totalorder %s27, 0
      %p200 = por %p198, %p199
      %p201 = scmp.ne.s32.totalorder %s187, %s188
      %p202 = scmp.eq.s32.totalorder %s28, 1
      %p203 = por %p201, %p202
      %p205 = scmp.ne.s32.totalorder %s188, %s204
      %p206 = scmp.eq.s32.totalorder %s28, 0
      %p207 = por %p205, %p206
      %p208 = scmp.le.s32.totalorder 1, %s22
      %p209 = scmp.lt.s32.totalorder %s22, 3
      %p210 = pnand %p208, %p209
      %p211 = pneg %p210
      // Predicated region
      $region9: #{qnetwork_forward.1} parent=5 // pred_check
        _
      $region10: #{qnetwork_forward.1} parent=5 // pred_check_branch
        %213 = sbr.rel (%p210) target = $region12
      $region11: #{qnetwork_forward.1} parent=5 // pred_region
        %s214 = ssub.s32 %s22, 1
        // Predicated region
        $region13: #{qnetwork_forward.1} parent=11 // pred_check
          %p215 = pneg %p69
        $region14: #{qnetwork_forward.1} parent=11 // pred_check_branch
          %217 = sbr.rel (%p215) target = $region16
        $region15: #{qnetwork_forward.1} parent=11 // pred_region
          %s219 = ssub.s32 128, 128
          %220 = vsyncadd [#allocation6], %s219
          %s221 = sshll.u32 [#allocation5], 4
          %s222 = int_to_ptr.vmem [resolvable:$true] %s221
          %227 = dma.hbm_to_vmem [thread:$0]  %s1, 128, %s222, [#allocation6], 64, 64, 4
        $region16: #{qnetwork_forward.1} parent=11 // pred_fallthru
          _
        // Predicated region
        $region17: #{qnetwork_forward.1} parent=11 // pred_check
          %p228 = pneg %p90
        $region18: #{qnetwork_forward.1} parent=11 // pred_check_branch
          %230 = sbr.rel (%p228) target = $region20
        $region19: #{qnetwork_forward.1} parent=11 // pred_region
          %s232 = ssub.s32 16, 16
          %233 = vsyncadd [#allocation6], %s232
          %s235 = sshll.u32 [#allocation7], 4
          %s236 = int_to_ptr.vmem [resolvable:$true] %s235
          %238 = dma.hbm_to_vmem [thread:$0]  %s2, 16, %s236, [#allocation6]
        $region20: #{qnetwork_forward.1} parent=11 // pred_fallthru
          _
        // Predicated region
        $region21: #{qnetwork_forward.1} parent=11 // pred_check
          %p239 = pneg %p111
        $region22: #{qnetwork_forward.1} parent=11 // pred_check_branch
          %241 = sbr.rel (%p239) target = $region24
        $region23: #{qnetwork_forward.1} parent=11 // pred_region
          %s243 = ssub.s32 1024, 1024
          %244 = vsyncadd [#allocation9], %s243
          %s245 = sshll.u32 [#allocation8], 4
          %s246 = int_to_ptr.vmem [resolvable:$true] %s245
          %251 = dma.hbm_to_vmem [thread:$0]  %s3, 1024, %s246, [#allocation9], 64, 64, 4
        $region24: #{qnetwork_forward.1} parent=11 // pred_fallthru
          _
        // Predicated region
        $region25: #{qnetwork_forward.1} parent=11 // pred_check
          %p252 = pneg %p132
        $region26: #{qnetwork_forward.1} parent=11 // pred_check_branch
          %254 = sbr.rel (%p252) target = $region28
        $region27: #{qnetwork_forward.1} parent=11 // pred_region
          %s256 = ssub.s32 16, 16
          %257 = vsyncadd [#allocation9], %s256
          %s259 = sshll.u32 [#allocation10], 4
          %s260 = int_to_ptr.vmem [resolvable:$true] %s259
          %262 = dma.hbm_to_vmem [thread:$0]  %s4, 16, %s260, [#allocation9]
        $region28: #{qnetwork_forward.1} parent=11 // pred_fallthru
          _
        // Predicated region
        $region29: #{qnetwork_forward.1} parent=11 // pred_check
          %p263 = pneg %p153
        $region30: #{qnetwork_forward.1} parent=11 // pred_check_branch
          %265 = sbr.rel (%p263) target = $region32
        $region31: #{qnetwork_forward.1} parent=11 // pred_region
          %s267 = ssub.s32 1024, 1024
          %268 = vsyncadd [#allocation12], %s267
          %s269 = sshll.u32 [#allocation11], 4
          %s270 = int_to_ptr.vmem [resolvable:$true] %s269
          %275 = dma.hbm_to_vmem [thread:$0]  %s5, 1024, %s270, [#allocation12], 64, 64, 4
        $region32: #{qnetwork_forward.1} parent=11 // pred_fallthru
          _
        // Predicated region
        $region33: #{qnetwork_forward.1} parent=11 // pred_check
          %p276 = pneg %p174
        $region34: #{qnetwork_forward.1} parent=11 // pred_check_branch
          %278 = sbr.rel (%p276) target = $region36
        $region35: #{qnetwork_forward.1} parent=11 // pred_region
          %s280 = ssub.s32 16, 16
          %281 = vsyncadd [#allocation12], %s280
          %s283 = sshll.u32 [#allocation13], 4
          %s284 = int_to_ptr.vmem [resolvable:$true] %s283
          %286 = dma.hbm_to_vmem [thread:$0]  %s6, 16, %s284, [#allocation12]
        $region36: #{qnetwork_forward.1} parent=11 // pred_fallthru
          _
      $region12: #{qnetwork_forward.1} parent=5 // pred_fallthru
        _
      %p287 = scmp.lt.s32.totalorder %s22, 2
      // Predicated region
      $region37: #{qnetwork_forward.1} parent=5 // pred_check
        %p288 = pneg %p287
      $region38: #{qnetwork_forward.1} parent=5 // pred_check_branch
        %290 = sbr.rel (%p288) target = $region40
      $region39: #{qnetwork_forward.1} parent=5 // pred_region
        // Predicated region
        $region41: #{qnetwork_forward.1} parent=39 // pred_check
          %p291 = pneg %p42
        $region42: #{qnetwork_forward.1} parent=39 // pred_check_branch
          %293 = sbr.rel (%p291) target = $region44
        $region43: #{qnetwork_forward.1} parent=39 // pred_region
          %s294 = sand.u32 %s32, 1
          %s295 = scalar_lea.sflag [#allocation3], %s294
          %s296 = sand.u32 %s32, 1
          %s297 = smul.addr %s296, 128
          %s298 = scalar_lea.vmem [#allocation2], %s297
          %s299 = smul.u32 16, %s22
          %s301 = ssub.s32 2048, 2048
          %302 = vsyncadd %s295, %s301
          %s303 = smul.addr %s299, 128
          %s304 = scalar_lea.hbm %s0, %s303
          %s305 = sshll.u32 %s298, 4
          %s306 = int_to_ptr.vmem [resolvable:$true] %s305
          %311 = dma.hbm_to_vmem [thread:$0]  %s304, 2048, %s306, %s295, 128, 128, 8
        $region44: #{qnetwork_forward.1} parent=39 // pred_fallthru
          _
      $region40: #{qnetwork_forward.1} parent=5 // pred_fallthru
        _
      %p312 = scmp.le.s32.totalorder 1, %s22
      %p313 = scmp.lt.s32.totalorder %s22, 3
      %p314 = pnand %p312, %p313
      %p315 = pneg %p314
      // Predicated region
      $region45: #{qnetwork_forward.1} parent=5 // pred_check
        _
      $region46: #{qnetwork_forward.1} parent=5 // pred_check_branch
        %317 = sbr.rel (%p314) target = $region48
      $region47: #{qnetwork_forward.1} parent=5 // pred_region
        %s318 = ssub.s32 %s22, 1
        %s319 = sand.u32 %s35, 1
        %s320 = scalar_lea.sflag [#allocation3], %s319
        %s321 = sand.u32 %s35, 1
        %s322 = smul.addr %s321, 128
        %s323 = scalar_lea.vmem [#allocation2], %s322
        // Predicated region
        $region49: #{qnetwork_forward.1} parent=47 // pred_check
          %p324 = pneg %p48
        $region50: #{qnetwork_forward.1} parent=47 // pred_check_branch
          %326 = sbr.rel (%p324) target = $region52
        $region51: #{qnetwork_forward.1} parent=47 // pred_region
          %327 = dma.done %s320, 2048
        $region52: #{qnetwork_forward.1} parent=47 // pred_fallthru
          _
        // Predicated region
        $region53: #{qnetwork_forward.1} parent=47 // pred_check
          %p328 = pneg %p69
        $region54: #{qnetwork_forward.1} parent=47 // pred_check_branch
          %330 = sbr.rel (%p328) target = $region56
        $region55: #{qnetwork_forward.1} parent=47 // pred_region
          %331 = dma.done [#allocation6], 128
        $region56: #{qnetwork_forward.1} parent=47 // pred_fallthru
          _
        // Predicated region
        $region57: #{qnetwork_forward.1} parent=47 // pred_check
          %p332 = pneg %p90
        $region58: #{qnetwork_forward.1} parent=47 // pred_check_branch
          %334 = sbr.rel (%p332) target = $region60
        $region59: #{qnetwork_forward.1} parent=47 // pred_region
          %335 = dma.done [#allocation6], 16
        $region60: #{qnetwork_forward.1} parent=47 // pred_fallthru
          _
        // Predicated region
        $region61: #{qnetwork_forward.1} parent=47 // pred_check
          %p336 = pneg %p111
        $region62: #{qnetwork_forward.1} parent=47 // pred_check_branch
          %338 = sbr.rel (%p336) target = $region64
        $region63: #{qnetwork_forward.1} parent=47 // pred_region
          %339 = dma.done [#allocation9], 1024
        $region64: #{qnetwork_forward.1} parent=47 // pred_fallthru
          _
        // Predicated region
        $region65: #{qnetwork_forward.1} parent=47 // pred_check
          %p340 = pneg %p132
        $region66: #{qnetwork_forward.1} parent=47 // pred_check_branch
          %342 = sbr.rel (%p340) target = $region68
        $region67: #{qnetwork_forward.1} parent=47 // pred_region
          %343 = dma.done [#allocation9], 16
        $region68: #{qnetwork_forward.1} parent=47 // pred_fallthru
          _
        // Predicated region
        $region69: #{qnetwork_forward.1} parent=47 // pred_check
          %p344 = pneg %p153
        $region70: #{qnetwork_forward.1} parent=47 // pred_check_branch
          %346 = sbr.rel (%p344) target = $region72
        $region71: #{qnetwork_forward.1} parent=47 // pred_region
          %347 = dma.done [#allocation12], 1024
        $region72: #{qnetwork_forward.1} parent=47 // pred_fallthru
          _
        // Predicated region
        $region73: #{qnetwork_forward.1} parent=47 // pred_check
          %p348 = pneg %p174
        $region74: #{qnetwork_forward.1} parent=47 // pred_check_branch
          %350 = sbr.rel (%p348) target = $region76
        $region75: #{qnetwork_forward.1} parent=47 // pred_region
          %351 = dma.done [#allocation12], 16
        $region76: #{qnetwork_forward.1} parent=47 // pred_fallthru
          _
        %s352 = sand.u32 %s35, 1
        %s353 = scalar_lea.sflag [#allocation3], %s352
        %s354 = sand.u32 %s35, 1
        %s355 = smul.addr %s354, 128
        %s356 = scalar_lea.vmem [#allocation2], %s355
        %p357 = pneg %p48
        %p358 = pneg %p45
        %p359 = pneg %p69
        %p360 = pneg %p66
        %p361 = pneg %p90
        %p362 = pneg %p87
        %p363 = pneg %p111
        %p364 = pneg %p108
        %p365 = pneg %p132
        %p366 = pneg %p129
        %p367 = pneg %p153
        %p368 = pneg %p150
        %p369 = pneg %p174
        %p370 = pneg %p171
        %p371 = pneg %p200
        %p372 = pneg %p197
        %s373 = sand.u32 %s187, 1
        %s374 = scalar_lea.sflag [#allocation4], %s373
        %s375 = sand.u32 %s187, 1
        %s376 = smul.addr %s375, 128
        %s377 = scalar_lea.vmem [#allocation14], %s376
        %s378 = smul.u32 16, %s27
        %s379 = smul.u32 16, %s27
        %v381 = vld [vmem:[%s323] sm:$0xff]
        %v382 = vld [vmem:[%s323 + $0x8] sm:$0xff]
        %v383 = vld [vmem:[%s323 + $0x10] sm:$0xff]
        %v384 = vld [vmem:[%s323 + $0x18] sm:$0xff]
        %v385 = vld [vmem:[%s323 + $0x20] sm:$0xff]
        %v386 = vld [vmem:[%s323 + $0x28] sm:$0xff]
        %v387 = vld [vmem:[%s323 + $0x30] sm:$0xff]
        %v388 = vld [vmem:[%s323 + $0x38] sm:$0xff]
        %v389 = vld [vmem:[%s323 + $0x40] sm:$0xff]
        %v390 = vld [vmem:[%s323 + $0x48] sm:$0xff]
        %v391 = vld [vmem:[%s323 + $0x50] sm:$0xff]
        %v392 = vld [vmem:[%s323 + $0x58] sm:$0xff]
        %v393 = vld [vmem:[%s323 + $0x60] sm:$0xff]
        %v394 = vld [vmem:[%s323 + $0x68] sm:$0xff]
        %v395 = vld [vmem:[%s323 + $0x70] sm:$0xff]
        %v396 = vld [vmem:[%s323 + $0x78] sm:$0xff]
        %v397 = vpack.c.bf16 %v382, %v381
        %v398 = vpack.c.bf16 %v384, %v383
        %v399 = vpack.c.bf16 %v386, %v385
        %v400 = vpack.c.bf16 %v388, %v387
        %v401 = vpack.c.bf16 %v390, %v389
        %v402 = vpack.c.bf16 %v392, %v391
        %v403 = vpack.c.bf16 %v394, %v393
        %v404 = vpack.c.bf16 %v396, %v395
        %v405 = vld [vmem:[#allocation5] sm:$0xf]
        %v406 = vld [vmem:[#allocation5 + $0x4] sm:$0xf]
        %v407 = vld [vmem:[#allocation7] sm:$0x1]
        %v409 = vlaneseq
        %v410 = vshrl.u32 %v409, 7
        %v411 = vsub.s32 0, %v410
        %v412 = vrot.slane %v407, %v411
        %v416 = vunpack.c.l.b16 %v405
        %v417 = vunpack.c.l.b16 %v406
        %v418 = vpack.c.b16 %v417, %v416
        %vm420 = vcmask 130048
        %v422 = vsel %vm420, %v397, 0
        %v425 = vsel %vm420, %v398, 0
        %v428 = vsel %vm420, %v399, 0
        %v431 = vsel %vm420, %v400, 0
        %v434 = vsel %vm420, %v401, 0
        %v437 = vsel %vm420, %v402, 0
        %v440 = vsel %vm420, %v403, 0
        %v443 = vsel %vm420, %v404, 0
        %445 = vmatprep.subr.bf16.mxu0 0
        %446 = vmatpush1.bf16.msra.mxu0 %v418
        %447 = vmatprep.subr.bf16.mxu0 0
        %448 = vmatpush1.bf16.msra.mxu0 0
        %449 = vmatprep.subr.bf16.mxu0 0
        %450 = vmatpush1.bf16.msra.mxu0 0
        %451 = vmatprep.subr.bf16.mxu0 0
        %452 = vmatpush1.bf16.msra.mxu0 0
        %453 = vmatprep.subr.bf16.mxu0 0
        %454 = vmatpush1.bf16.msra.mxu0 0
        %455 = vmatprep.subr.bf16.mxu0 0
        %456 = vmatpush1.bf16.msra.mxu0 0
        %457 = vmatprep.subr.bf16.mxu0 0
        %458 = vmatpush1.bf16.msra.mxu0 0
        %459 = vmatprep.subr.bf16.mxu0 0
        %460 = vmatpush1.bf16.msra.mxu0 0
        %461 = vmatprep.subr.bf16.mxu0 0
        %462 = vmatpush1.bf16.msra.mxu0 0
        %463 = vmatprep.subr.bf16.mxu0 0
        %464 = vmatpush1.bf16.msra.mxu0 0
        %465 = vmatprep.subr.bf16.mxu0 0
        %466 = vmatpush1.bf16.msra.mxu0 0
        %467 = vmatprep.subr.bf16.mxu0 0
        %468 = vmatpush1.bf16.msra.mxu0 0
        %469 = vmatprep.subr.bf16.mxu0 0
        %470 = vmatpush1.bf16.msra.mxu0 0
        %471 = vmatprep.subr.bf16.mxu0 0
        %472 = vmatpush1.bf16.msra.mxu0 0
        %473 = vmatprep.subr.bf16.mxu0 0
        %474 = vmatpush1.bf16.msra.mxu0 0
        %475 = vmatprep.subr.bf16.mxu0 0
        %476 = vmatpush1.bf16.msra.mxu0 0
        %477 = vmatprep.mubr.bf16.mxu0 0
        %478 = vmatmul.mubr.bf16.gmra.mrb[0].mxu0 %v422
        %v479 = vpop.f32.mrb[0].mxu0
        %v480 = vadd.f32 %v412, %v479
        %v481 = vpop.f32.mrb[0].mxu0
        %v482 = vpop.f32.mrb[0].mxu0
        %v483 = vadd.f32 %v412, %v482
        %v484 = vpop.f32.mrb[0].mxu0
        %485 = vmatprep.mubr.bf16.mxu0 0
        %486 = vmatmul.mubr.bf16.gmra.mrb[0].mxu0 %v425
        %v487 = vpop.f32.mrb[0].mxu0
        %v488 = vadd.f32 %v412, %v487
        %v489 = vpop.f32.mrb[0].mxu0
        %v490 = vpop.f32.mrb[0].mxu0
        %v491 = vadd.f32 %v412, %v490
        %v492 = vpop.f32.mrb[0].mxu0
        %493 = vmatprep.mubr.bf16.mxu0 0
        %494 = vmatmul.mubr.bf16.gmra.mrb[0].mxu0 %v428
        %v495 = vpop.f32.mrb[0].mxu0
        %v496 = vadd.f32 %v412, %v495
        %v497 = vpop.f32.mrb[0].mxu0
        %v498 = vpop.f32.mrb[0].mxu0
        %v499 = vadd.f32 %v412, %v498
        %v500 = vpop.f32.mrb[0].mxu0
        %501 = vmatprep.mubr.bf16.mxu0 0
        %502 = vmatmul.mubr.bf16.gmra.mrb[0].mxu0 %v431
        %v503 = vpop.f32.mrb[0].mxu0
        %v504 = vadd.f32 %v412, %v503
        %v505 = vpop.f32.mrb[0].mxu0
        %v506 = vpop.f32.mrb[0].mxu0
        %v507 = vadd.f32 %v412, %v506
        %v508 = vpop.f32.mrb[0].mxu0
        %509 = vmatprep.mubr.bf16.mxu0 0
        %510 = vmatmul.mubr.bf16.gmra.mrb[0].mxu0 %v434
        %v511 = vpop.f32.mrb[0].mxu0
        %v512 = vadd.f32 %v412, %v511
        %v513 = vpop.f32.mrb[0].mxu0
        %v514 = vpop.f32.mrb[0].mxu0
        %v515 = vadd.f32 %v412, %v514
        %v516 = vpop.f32.mrb[0].mxu0
        %517 = vmatprep.mubr.bf16.mxu0 0
        %518 = vmatmul.mubr.bf16.gmra.mrb[0].mxu0 %v437
        %v519 = vpop.f32.mrb[0].mxu0
        %v520 = vadd.f32 %v412, %v519
        %v521 = vpop.f32.mrb[0].mxu0
        %v522 = vpop.f32.mrb[0].mxu0
        %v523 = vadd.f32 %v412, %v522
        %v524 = vpop.f32.mrb[0].mxu0
        %525 = vmatprep.mubr.bf16.mxu0 0
        %526 = vmatmul.mubr.bf16.gmra.mrb[0].mxu0 %v440
        %v527 = vpop.f32.mrb[0].mxu0
        %v528 = vadd.f32 %v412, %v527
        %v529 = vpop.f32.mrb[0].mxu0
        %v530 = vpop.f32.mrb[0].mxu0
        %v531 = vadd.f32 %v412, %v530
        %v532 = vpop.f32.mrb[0].mxu0
        %533 = vmatprep.mubr.bf16.mxu0 0
        %534 = vmatmul.mubr.bf16.gmra.mrb[0].mxu0 %v443
        %v535 = vpop.f32.mrb[0].mxu0
        %v536 = vadd.f32 %v412, %v535
        %v537 = vpop.f32.mrb[0].mxu0
        %v538 = vpop.f32.mrb[0].mxu0
        %v539 = vadd.f32 %v412, %v538
        %v540 = vpop.f32.mrb[0].mxu0
        %541 = vdwg.mxu0
        %v542 = vmax.f32 %v480, 0.0
        %v543 = vmax.f32 %v483, 0.0
        %v544 = vmax.f32 %v488, 0.0
        %v545 = vmax.f32 %v491, 0.0
        %v546 = vmax.f32 %v496, 0.0
        %v547 = vmax.f32 %v499, 0.0
        %v548 = vmax.f32 %v504, 0.0
        %v549 = vmax.f32 %v507, 0.0
        %v550 = vmax.f32 %v512, 0.0
        %v551 = vmax.f32 %v515, 0.0
        %v552 = vmax.f32 %v520, 0.0
        %v553 = vmax.f32 %v523, 0.0
        %v554 = vmax.f32 %v528, 0.0
        %v555 = vmax.f32 %v531, 0.0
        %v556 = vmax.f32 %v536, 0.0
        %v557 = vmax.f32 %v539, 0.0
        %v558 = vpack.c.bf16 %v543, %v542
        %v559 = vpack.c.bf16 %v545, %v544
        %v560 = vpack.c.bf16 %v547, %v546
        %v561 = vpack.c.bf16 %v549, %v548
        %v562 = vpack.c.bf16 %v551, %v550
        %v563 = vpack.c.bf16 %v553, %v552
        %v564 = vpack.c.bf16 %v555, %v554
        %v565 = vpack.c.bf16 %v557, %v556
        %v566 = vld [vmem:[#allocation8] sm:$0xf]
        %v567 = vld [vmem:[#allocation8 + $0x4] sm:$0xf]
        %v568 = vld [vmem:[#allocation8 + $0x8] sm:$0xf]
        %v569 = vld [vmem:[#allocation8 + $0xc] sm:$0xf]
        %v570 = vld [vmem:[#allocation8 + $0x10] sm:$0xf]
        %v571 = vld [vmem:[#allocation8 + $0x14] sm:$0xf]
        %v572 = vld [vmem:[#allocation8 + $0x18] sm:$0xf]
        %v573 = vld [vmem:[#allocation8 + $0x1c] sm:$0xf]
        %v574 = vld [vmem:[#allocation8 + $0x20] sm:$0xf]
        %v575 = vld [vmem:[#allocation8 + $0x24] sm:$0xf]
        %v576 = vld [vmem:[#allocation8 + $0x28] sm:$0xf]
        %v577 = vld [vmem:[#allocation8 + $0x2c] sm:$0xf]
        %v578 = vld [vmem:[#allocation8 + $0x30] sm:$0xf]
        %v579 = vld [vmem:[#allocation8 + $0x34] sm:$0xf]
        %v580 = vld [vmem:[#allocation8 + $0x38] sm:$0xf]
        %v581 = vld [vmem:[#allocation8 + $0x3c] sm:$0xf]
        %v582 = vld [vmem:[#allocation10] sm:$0x1]
        %v584 = vlaneseq
        %v585 = vshrl.u32 %v584, 7
        %v586 = vsub.s32 0, %v585
        %v587 = vrot.slane %v582, %v586
        %v605 = vunpack.c.l.b16 %v566
        %v606 = vunpack.c.l.b16 %v567
        %v607 = vunpack.c.l.b16 %v568
        %v608 = vunpack.c.l.b16 %v569
        %v609 = vunpack.c.l.b16 %v570
        %v610 = vunpack.c.l.b16 %v571
        %v611 = vunpack.c.l.b16 %v572
        %v612 = vunpack.c.l.b16 %v573
        %v613 = vunpack.c.l.b16 %v574
        %v614 = vunpack.c.l.b16 %v575
        %v615 = vunpack.c.l.b16 %v576
        %v616 = vunpack.c.l.b16 %v577
        %v617 = vunpack.c.l.b16 %v578
        %v618 = vunpack.c.l.b16 %v579
        %v619 = vunpack.c.l.b16 %v580
        %v620 = vunpack.c.l.b16 %v581
        %v621 = vpack.c.b16 %v606, %v605
        %v622 = vpack.c.b16 %v608, %v607
        %v623 = vpack.c.b16 %v610, %v609
        %v624 = vpack.c.b16 %v612, %v611
        %v625 = vpack.c.b16 %v614, %v613
        %v626 = vpack.c.b16 %v616, %v615
        %v627 = vpack.c.b16 %v618, %v617
        %v628 = vpack.c.b16 %v620, %v619
        %637 = vmatprep.subr.bf16.mxu0 0
        %638 = vmatpush1.bf16.msra.mxu0 %v621
        %639 = vmatprep.subr.bf16.mxu0 0
        %640 = vmatpush1.bf16.msra.mxu0 %v622
        %641 = vmatprep.subr.bf16.mxu0 0
        %642 = vmatpush1.bf16.msra.mxu0 %v623
        %643 = vmatprep.subr.bf16.mxu0 0
        %644 = vmatpush1.bf16.msra.mxu0 %v624
        %645 = vmatprep.subr.bf16.mxu0 0
        %646 = vmatpush1.bf16.msra.mxu0 %v625
        %647 = vmatprep.subr.bf16.mxu0 0
        %648 = vmatpush1.bf16.msra.mxu0 %v626
        %649 = vmatprep.subr.bf16.mxu0 0
        %650 = vmatpush1.bf16.msra.mxu0 %v627
        %651 = vmatprep.subr.bf16.mxu0 0
        %652 = vmatpush1.bf16.msra.mxu0 %v628
        %653 = vmatprep.subr.bf16.mxu0 0
        %654 = vmatpush1.bf16.msra.mxu0 0
        %655 = vmatprep.subr.bf16.mxu0 0
        %656 = vmatpush1.bf16.msra.mxu0 0
        %657 = vmatprep.subr.bf16.mxu0 0
        %658 = vmatpush1.bf16.msra.mxu0 0
        %659 = vmatprep.subr.bf16.mxu0 0
        %660 = vmatpush1.bf16.msra.mxu0 0
        %661 = vmatprep.subr.bf16.mxu0 0
        %662 = vmatpush1.bf16.msra.mxu0 0
        %663 = vmatprep.subr.bf16.mxu0 0
        %664 = vmatpush1.bf16.msra.mxu0 0
        %665 = vmatprep.subr.bf16.mxu0 0
        %666 = vmatpush1.bf16.msra.mxu0 0
        %667 = vmatprep.subr.bf16.mxu0 0
        %668 = vmatpush1.bf16.msra.mxu0 0
        %669 = vmatprep.mubr.bf16.mxu0 0
        %670 = vmatmul.mubr.bf16.gmra.mrb[0].mxu0 %v558
        %v671 = vpop.f32.mrb[0].mxu0
        %v672 = vadd.f32 %v587, %v671
        %v673 = vpop.f32.mrb[0].mxu0
        %v674 = vpop.f32.mrb[0].mxu0
        %v675 = vadd.f32 %v587, %v674
        %v676 = vpop.f32.mrb[0].mxu0
        %677 = vmatprep.mubr.bf16.mxu0 0
        %678 = vmatmul.mubr.bf16.gmra.mrb[0].mxu0 %v559
        %v679 = vpop.f32.mrb[0].mxu0
        %v680 = vadd.f32 %v587, %v679
        %v681 = vpop.f32.mrb[0].mxu0
        %v682 = vpop.f32.mrb[0].mxu0
        %v683 = vadd.f32 %v587, %v682
        %v684 = vpop.f32.mrb[0].mxu0
        %685 = vmatprep.mubr.bf16.mxu0 0
        %686 = vmatmul.mubr.bf16.gmra.mrb[0].mxu0 %v560
        %v687 = vpop.f32.mrb[0].mxu0
        %v688 = vadd.f32 %v587, %v687
        %v689 = vpop.f32.mrb[0].mxu0
        %v690 = vpop.f32.mrb[0].mxu0
        %v691 = vadd.f32 %v587, %v690
        %v692 = vpop.f32.mrb[0].mxu0
        %693 = vmatprep.mubr.bf16.mxu0 0
        %694 = vmatmul.mubr.bf16.gmra.mrb[0].mxu0 %v561
        %v695 = vpop.f32.mrb[0].mxu0
        %v696 = vadd.f32 %v587, %v695
        %v697 = vpop.f32.mrb[0].mxu0
        %v698 = vpop.f32.mrb[0].mxu0
        %v699 = vadd.f32 %v587, %v698
        %v700 = vpop.f32.mrb[0].mxu0
        %701 = vmatprep.mubr.bf16.mxu0 0
        %702 = vmatmul.mubr.bf16.gmra.mrb[0].mxu0 %v562
        %v703 = vpop.f32.mrb[0].mxu0
        %v704 = vadd.f32 %v587, %v703
        %v705 = vpop.f32.mrb[0].mxu0
        %v706 = vpop.f32.mrb[0].mxu0
        %v707 = vadd.f32 %v587, %v706
        %v708 = vpop.f32.mrb[0].mxu0
        %709 = vmatprep.mubr.bf16.mxu0 0
        %710 = vmatmul.mubr.bf16.gmra.mrb[0].mxu0 %v563
        %v711 = vpop.f32.mrb[0].mxu0
        %v712 = vadd.f32 %v587, %v711
        %v713 = vpop.f32.mrb[0].mxu0
        %v714 = vpop.f32.mrb[0].mxu0
        %v715 = vadd.f32 %v587, %v714
        %v716 = vpop.f32.mrb[0].mxu0
        %717 = vmatprep.mubr.bf16.mxu0 0
        %718 = vmatmul.mubr.bf16.gmra.mrb[0].mxu0 %v564
        %v719 = vpop.f32.mrb[0].mxu0
        %v720 = vadd.f32 %v587, %v719
        %v721 = vpop.f32.mrb[0].mxu0
        %v722 = vpop.f32.mrb[0].mxu0
        %v723 = vadd.f32 %v587, %v722
        %v724 = vpop.f32.mrb[0].mxu0
        %725 = vmatprep.mubr.bf16.mxu0 0
        %726 = vmatmul.mubr.bf16.gmra.mrb[0].mxu0 %v565
        %v727 = vpop.f32.mrb[0].mxu0
        %v728 = vadd.f32 %v587, %v727
        %v729 = vpop.f32.mrb[0].mxu0
        %v730 = vpop.f32.mrb[0].mxu0
        %v731 = vadd.f32 %v587, %v730
        %v732 = vpop.f32.mrb[0].mxu0
        %733 = vdwg.mxu0
        %v734 = vmax.f32 %v672, 0.0
        %v735 = vmax.f32 %v675, 0.0
        %v736 = vmax.f32 %v680, 0.0
        %v737 = vmax.f32 %v683, 0.0
        %v738 = vmax.f32 %v688, 0.0
        %v739 = vmax.f32 %v691, 0.0
        %v740 = vmax.f32 %v696, 0.0
        %v741 = vmax.f32 %v699, 0.0
        %v742 = vmax.f32 %v704, 0.0
        %v743 = vmax.f32 %v707, 0.0
        %v744 = vmax.f32 %v712, 0.0
        %v745 = vmax.f32 %v715, 0.0
        %v746 = vmax.f32 %v720, 0.0
        %v747 = vmax.f32 %v723, 0.0
        %v748 = vmax.f32 %v728, 0.0
        %v749 = vmax.f32 %v731, 0.0
        %v750 = vpack.c.bf16 %v735, %v734
        %v751 = vpack.c.bf16 %v737, %v736
        %v752 = vpack.c.bf16 %v739, %v738
        %v753 = vpack.c.bf16 %v741, %v740
        %v754 = vpack.c.bf16 %v743, %v742
        %v755 = vpack.c.bf16 %v745, %v744
        %v756 = vpack.c.bf16 %v747, %v746
        %v757 = vpack.c.bf16 %v749, %v748
        %v758 = vld [vmem:[#allocation11] sm:$0xf]
        %v759 = vld [vmem:[#allocation11 + $0x4] sm:$0xf]
        %v760 = vld [vmem:[#allocation11 + $0x8] sm:$0xf]
        %v761 = vld [vmem:[#allocation11 + $0xc] sm:$0xf]
        %v762 = vld [vmem:[#allocation11 + $0x10] sm:$0xf]
        %v763 = vld [vmem:[#allocation11 + $0x14] sm:$0xf]
        %v764 = vld [vmem:[#allocation11 + $0x18] sm:$0xf]
        %v765 = vld [vmem:[#allocation11 + $0x1c] sm:$0xf]
        %v766 = vld [vmem:[#allocation11 + $0x20] sm:$0xf]
        %v767 = vld [vmem:[#allocation11 + $0x24] sm:$0xf]
        %v768 = vld [vmem:[#allocation11 + $0x28] sm:$0xf]
        %v769 = vld [vmem:[#allocation11 + $0x2c] sm:$0xf]
        %v770 = vld [vmem:[#allocation11 + $0x30] sm:$0xf]
        %v771 = vld [vmem:[#allocation11 + $0x34] sm:$0xf]
        %v772 = vld [vmem:[#allocation11 + $0x38] sm:$0xf]
        %v773 = vld [vmem:[#allocation11 + $0x3c] sm:$0xf]
        %v774 = vld [vmem:[#allocation13] sm:$0x1]
        %v776 = vlaneseq
        %v777 = vshrl.u32 %v776, 7
        %v778 = vsub.s32 0, %v777
        %v779 = vrot.slane %v774, %v778
        %v797 = vunpack.c.l.b16 %v758
        %v798 = vunpack.c.l.b16 %v759
        %v799 = vunpack.c.l.b16 %v760
        %v800 = vunpack.c.l.b16 %v761
        %v801 = vunpack.c.l.b16 %v762
        %v802 = vunpack.c.l.b16 %v763
        %v803 = vunpack.c.l.b16 %v764
        %v804 = vunpack.c.l.b16 %v765
        %v805 = vunpack.c.l.b16 %v766
        %v806 = vunpack.c.l.b16 %v767
        %v807 = vunpack.c.l.b16 %v768
        %v808 = vunpack.c.l.b16 %v769
        %v809 = vunpack.c.l.b16 %v770
        %v810 = vunpack.c.l.b16 %v771
        %v811 = vunpack.c.l.b16 %v772
        %v812 = vunpack.c.l.b16 %v773
        %v813 = vpack.c.b16 %v798, %v797
        %v814 = vpack.c.b16 %v800, %v799
        %v815 = vpack.c.b16 %v802, %v801
        %v816 = vpack.c.b16 %v804, %v803
        %v817 = vpack.c.b16 %v806, %v805
        %v818 = vpack.c.b16 %v808, %v807
        %v819 = vpack.c.b16 %v810, %v809
        %v820 = vpack.c.b16 %v812, %v811
        %829 = vmatprep.subr.bf16.mxu0 0
        %830 = vmatpush1.bf16.msra.mxu0 %v813
        %831 = vmatprep.subr.bf16.mxu0 0
        %832 = vmatpush1.bf16.msra.mxu0 %v814
        %833 = vmatprep.subr.bf16.mxu0 0
        %834 = vmatpush1.bf16.msra.mxu0 %v815
        %835 = vmatprep.subr.bf16.mxu0 0
        %836 = vmatpush1.bf16.msra.mxu0 %v816
        %837 = vmatprep.subr.bf16.mxu0 0
        %838 = vmatpush1.bf16.msra.mxu0 %v817
        %839 = vmatprep.subr.bf16.mxu0 0
        %840 = vmatpush1.bf16.msra.mxu0 %v818
        %841 = vmatprep.subr.bf16.mxu0 0
        %842 = vmatpush1.bf16.msra.mxu0 %v819
        %843 = vmatprep.subr.bf16.mxu0 0
        %844 = vmatpush1.bf16.msra.mxu0 %v820
        %845 = vmatprep.subr.bf16.mxu0 0
        %846 = vmatpush1.bf16.msra.mxu0 0
        %847 = vmatprep.subr.bf16.mxu0 0
        %848 = vmatpush1.bf16.msra.mxu0 0
        %849 = vmatprep.subr.bf16.mxu0 0
        %850 = vmatpush1.bf16.msra.mxu0 0
        %851 = vmatprep.subr.bf16.mxu0 0
        %852 = vmatpush1.bf16.msra.mxu0 0
        %853 = vmatprep.subr.bf16.mxu0 0
        %854 = vmatpush1.bf16.msra.mxu0 0
        %855 = vmatprep.subr.bf16.mxu0 0
        %856 = vmatpush1.bf16.msra.mxu0 0
        %857 = vmatprep.subr.bf16.mxu0 0
        %858 = vmatpush1.bf16.msra.mxu0 0
        %859 = vmatprep.subr.bf16.mxu0 0
        %860 = vmatpush1.bf16.msra.mxu0 0
        %861 = vmatprep.mubr.bf16.mxu0 0
        %862 = vmatmul.mubr.bf16.gmra.mrb[0].mxu0 %v750
        %v863 = vpop.f32.mrb[0].mxu0
        %v864 = vadd.f32 %v779, %v863
        %v865 = vpop.f32.mrb[0].mxu0
        %v866 = vpop.f32.mrb[0].mxu0
        %v867 = vadd.f32 %v779, %v866
        %v868 = vpop.f32.mrb[0].mxu0
        %869 = vmatprep.mubr.bf16.mxu0 0
        %870 = vmatmul.mubr.bf16.gmra.mrb[0].mxu0 %v751
        %v871 = vpop.f32.mrb[0].mxu0
        %v872 = vadd.f32 %v779, %v871
        %v873 = vpop.f32.mrb[0].mxu0
        %v874 = vpop.f32.mrb[0].mxu0
        %v875 = vadd.f32 %v779, %v874
        %v876 = vpop.f32.mrb[0].mxu0
        %877 = vmatprep.mubr.bf16.mxu0 0
        %878 = vmatmul.mubr.bf16.gmra.mrb[0].mxu0 %v752
        %v879 = vpop.f32.mrb[0].mxu0
        %v880 = vadd.f32 %v779, %v879
        %v881 = vpop.f32.mrb[0].mxu0
        %v882 = vpop.f32.mrb[0].mxu0
        %v883 = vadd.f32 %v779, %v882
        %v884 = vpop.f32.mrb[0].mxu0
        %885 = vmatprep.mubr.bf16.mxu0 0
        %886 = vmatmul.mubr.bf16.gmra.mrb[0].mxu0 %v753
        %v887 = vpop.f32.mrb[0].mxu0
        %v888 = vadd.f32 %v779, %v887
        %v889 = vpop.f32.mrb[0].mxu0
        %v890 = vpop.f32.mrb[0].mxu0
        %v891 = vadd.f32 %v779, %v890
        %v892 = vpop.f32.mrb[0].mxu0
        %893 = vmatprep.mubr.bf16.mxu0 0
        %894 = vmatmul.mubr.bf16.gmra.mrb[0].mxu0 %v754
        %v895 = vpop.f32.mrb[0].mxu0
        %v896 = vadd.f32 %v779, %v895
        %v897 = vpop.f32.mrb[0].mxu0
        %v898 = vpop.f32.mrb[0].mxu0
        %v899 = vadd.f32 %v779, %v898
        %v900 = vpop.f32.mrb[0].mxu0
        %901 = vmatprep.mubr.bf16.mxu0 0
        %902 = vmatmul.mubr.bf16.gmra.mrb[0].mxu0 %v755
        %v903 = vpop.f32.mrb[0].mxu0
        %v904 = vadd.f32 %v779, %v903
        %v905 = vpop.f32.mrb[0].mxu0
        %v906 = vpop.f32.mrb[0].mxu0
        %v907 = vadd.f32 %v779, %v906
        %v908 = vpop.f32.mrb[0].mxu0
        %909 = vmatprep.mubr.bf16.mxu0 0
        %910 = vmatmul.mubr.bf16.gmra.mrb[0].mxu0 %v756
        %v911 = vpop.f32.mrb[0].mxu0
        %v912 = vadd.f32 %v779, %v911
        %v913 = vpop.f32.mrb[0].mxu0
        %v914 = vpop.f32.mrb[0].mxu0
        %v915 = vadd.f32 %v779, %v914
        %v916 = vpop.f32.mrb[0].mxu0
        %917 = vmatprep.mubr.bf16.mxu0 0
        %918 = vmatmul.mubr.bf16.gmra.mrb[0].mxu0 %v757
        %v919 = vpop.f32.mrb[0].mxu0
        %v920 = vadd.f32 %v779, %v919
        %v921 = vpop.f32.mrb[0].mxu0
        %v922 = vpop.f32.mrb[0].mxu0
        %v923 = vadd.f32 %v779, %v922
        %v924 = vpop.f32.mrb[0].mxu0
        %925 = vdwg.mxu0
        %926 = vst [vmem:[%s377] sm:$0xff] %v864
        %927 = vst [vmem:[%s377 + $0x8] sm:$0xff] %v867
        %928 = vst [vmem:[%s377 + $0x10] sm:$0xff] %v872
        %929 = vst [vmem:[%s377 + $0x18] sm:$0xff] %v875
        %930 = vst [vmem:[%s377 + $0x20] sm:$0xff] %v880
        %931 = vst [vmem:[%s377 + $0x28] sm:$0xff] %v883
        %932 = vst [vmem:[%s377 + $0x30] sm:$0xff] %v888
        %933 = vst [vmem:[%s377 + $0x38] sm:$0xff] %v891
        %934 = vst [vmem:[%s377 + $0x40] sm:$0xff] %v896
        %935 = vst [vmem:[%s377 + $0x48] sm:$0xff] %v899
        %936 = vst [vmem:[%s377 + $0x50] sm:$0xff] %v904
        %937 = vst [vmem:[%s377 + $0x58] sm:$0xff] %v907
        %938 = vst [vmem:[%s377 + $0x60] sm:$0xff] %v912
        %939 = vst [vmem:[%s377 + $0x68] sm:$0xff] %v915
        %940 = vst [vmem:[%s377 + $0x70] sm:$0xff] %v920
        %941 = vst [vmem:[%s377 + $0x78] sm:$0xff] %v923
        %s942 = sand.u32 %s187, 1
        %s943 = scalar_lea.sflag [#allocation4], %s942
        %s944 = sand.u32 %s187, 1
        %s945 = smul.addr %s944, 128
        %s946 = scalar_lea.vmem [#allocation14], %s945
        // Predicated region
        $region77: #{qnetwork_forward.1} parent=47 // pred_check
          %p947 = pneg %p197
        $region78: #{qnetwork_forward.1} parent=47 // pred_check_branch
          %949 = sbr.rel (%p947) target = $region80
        $region79: #{qnetwork_forward.1} parent=47 // pred_region
          %s950 = smul.u32 16, %s27
          %s952 = ssub.s32 2048, 2048
          %953 = vsyncadd %s943, %s952
          %s954 = smul.addr %s950, 128
          %s955 = scalar_lea.hbm %s7, %s954
          %s956 = sshll.u32 %s946, 4
          %s957 = int_to_ptr.vmem [resolvable:$true] %s956
          %962 = dma.vmem_to_hbm [thread:$0]  %s957, 2048, %s955, %s943, 128, 128, 8
        $region80: #{qnetwork_forward.1} parent=47 // pred_fallthru
          _
      $region48: #{qnetwork_forward.1} parent=5 // pred_fallthru
        _
      %p963 = scmp.le.s32.totalorder 2, %s22
      // Predicated region
      $region81: #{qnetwork_forward.1} parent=5 // pred_check
        %p964 = pneg %p963
      $region82: #{qnetwork_forward.1} parent=5 // pred_check_branch
        %966 = sbr.rel (%p964) target = $region84
      $region83: #{qnetwork_forward.1} parent=5 // pred_region
        %s967 = ssub.s32 %s22, 2
        // Predicated region
        $region85: #{qnetwork_forward.1} parent=83 // pred_check
          %p968 = pneg %p203
        $region86: #{qnetwork_forward.1} parent=83 // pred_check_branch
          %970 = sbr.rel (%p968) target = $region88
        $region87: #{qnetwork_forward.1} parent=83 // pred_region
          %s971 = sand.u32 %s188, 1
          %s972 = scalar_lea.sflag [#allocation4], %s971
          %s973 = sand.u32 %s188, 1
          %s974 = smul.addr %s973, 128
          %s975 = scalar_lea.vmem [#allocation14], %s974
          %976 = dma.done %s972, 2048
        $region88: #{qnetwork_forward.1} parent=83 // pred_fallthru
          _
      $region84: #{qnetwork_forward.1} parent=5 // pred_fallthru
        _
    $region6: #{qnetwork_forward.1} parent=1 // loop_footer
      %s26 = sadd.s32 1, %s22
    $region7: #{qnetwork_forward.1} parent=1 // loop_footer_branch
      %21 = sbr.rel target = $region3
    $region8: #{qnetwork_forward.1} parent=1 // loop_exit
      _
    %977 = vsyncpa [#allocation3], 1
    %s978 = scalar_lea.sflag [#allocation3], 1
    %979 = vsyncpa %s978, 1
    %980 = vsyncpa [#allocation6], 1
    %981 = vsyncpa [#allocation9], 1
    %982 = vsyncpa [#allocation12], 1
    %983 = vsyncpa [#allocation4], 1
    %s984 = scalar_lea.sflag [#allocation4], 1
    %985 = vsyncpa %s984, 1

</llo_original>
